<compile_context>
chip_gen: v7x
topology: tpu7x:2x2x1
jax: 0.10.0
libtpu: 0.0.40
codegen_flags: <defaults>
</compile_context>

<pallas_src>
import jax
import jax.numpy as jnp
from jax.experimental import pallas as pl
from jax.experimental.pallas import tpu as pltpu


# --------------------------------------------------------------------------
# Kernel body
# --------------------------------------------------------------------------
def _imputer_kernel(h_ref, w1_ref, b1_ref, w2_ref, b2_ref, o_ref):
    """sigmoid(relu(h @ W1 + b1) @ W2 + b2) on one row tile."""
    # h arrives in its HBM dtype (usually f32); the bf16 cast feeding the MXU
    # is VPU work that hides under the DMA bottleneck.  Accumulation is f32.
    x = h_ref[...].astype(w1_ref.dtype)
    z = jnp.dot(x, w1_ref[...], preferred_element_type=jnp.float32)
    z = jnp.maximum(z + b1_ref[...], 0.0)                   # bias + ReLU (VPU)
    y = jnp.dot(z.astype(w2_ref.dtype), w2_ref[...],
                preferred_element_type=jnp.float32)
    y = y + b2_ref[...]
    o_ref[...] = jax.nn.sigmoid(y).astype(o_ref.dtype)      # exp -> EUP slot


# --------------------------------------------------------------------------
# Tiling / fold helpers
# --------------------------------------------------------------------------
def _round_up(x, m):
    return ((x + m - 1) // m) * m


def _pick_fold(n_rows, dim_emb, dim_output):
    """Largest row-fold (8/4/2) that divides N and keeps folded widths small."""
    if min(dim_emb, dim_output) >= 128:
        return 1  # feature axis already lane-dense
    for f in (8, 4, 2):
        if n_rows % f == 0 and f * dim_emb <= 512 and f * dim_output <= 1024:
            return f
    return 1


def _block_diag_copies(w, fold):
    """[in, out] -> [fold*in, fold*out] with `fold` copies of w on the diagonal."""
    if fold == 1:
        return w
    return jnp.kron(jnp.eye(fold, dtype=w.dtype), w)


def _tile_rows_cap(in_w, hid_w, out_w, in_bytes, out_bytes,
                   budget_bytes=16 * 1024 * 1024):
    """Largest row tile whose per-step VMEM footprint stays under `budget`."""
    per_row = (2 * in_w * in_bytes       # h block, double-buffered
               + 2 * out_w * out_bytes   # out block, double-buffered
               + 2 * in_w                # bf16 copy of h fed to the MXU
               + 6 * hid_w               # z in f32 + bf16
               + 4 * out_w)              # y in f32
    return max(256, (budget_bytes // per_row) // 16 * 16)


def _choose_tiles(n_rows, cap, requested_tm=None):
    """Pick (tm, n_tiles): tm multiple of 16, n_tiles small and even when > 1."""
    if requested_tm is not None:
        tm = _round_up(max(int(requested_tm), 16), 16)
        return tm, pl.cdiv(n_rows, tm)
    cap = max(16, (cap // 16) * 16)
    if n_rows <= min(cap, 1024):
        return _round_up(n_rows, 16), 1          # single step; tiny inputs
    n_tiles = max(2, pl.cdiv(n_rows, cap))
    if n_tiles % 2:
        n_tiles += 1                             # even count -> both v7x TCs busy
    tm = _round_up(pl.cdiv(n_rows, n_tiles), 16)
    return tm, pl.cdiv(n_rows, tm)


# --------------------------------------------------------------------------
# Public wrapper
# --------------------------------------------------------------------------
def imputer_forward(h, w1_t, b1, w2_t, b2, *, tm=None, fold=None,
                    compute_dtype=jnp.bfloat16, out_dtype=None):
    """Imputer forward: sigmoid(relu(h @ W1^T + b1) @ W2^T + b2).

    h:    [N, dim_emb]             (any float dtype; read as-is, no extra pass)
    w1_t: [dim_emb, hiddens]       (first nn.Linear weight, transposed)
    b1:   [hiddens]
    w2_t: [hiddens, dim_output]    (second nn.Linear weight, transposed)
    b2:   [dim_output]
    """
    N, dim_emb = h.shape
    hiddens = w1_t.shape[1]
    dim_output = w2_t.shape[1]
    if out_dtype is None:
        out_dtype = h.dtype
    if N == 0:
        return jnp.zeros((0, dim_output), out_dtype)

    if fold is None:
        fold = _pick_fold(N, dim_emb, dim_output)
    elif fold < 1 or (fold > 1 and N % fold != 0):
        raise ValueError(f"fold={fold} must be >= 1 and divide N={N}")

    in_w, hid_w, out_w = fold * dim_emb, fold * hiddens, fold * dim_output
    n_rows = N // fold

    # Weight prep is tiny (a few KB) and independent of N.
    w1_f = _block_diag_copies(w1_t.astype(compute_dtype), fold)   # [in_w, hid_w]
    w2_f = _block_diag_copies(w2_t.astype(compute_dtype), fold)   # [hid_w, out_w]
    b1_f = jnp.tile(b1.astype(jnp.float32), fold).reshape(1, hid_w)
    b2_f = jnp.tile(b2.astype(jnp.float32), fold).reshape(1, out_w)

    # Free row-major view: folded row r holds original rows [fold*r, fold*(r+1)).
    h_f = h.reshape(n_rows, in_w)

    h_bytes = h.dtype.itemsize
    o_bytes = jnp.dtype(out_dtype).itemsize
    w_bytes = jnp.dtype(compute_dtype).itemsize
    cap = _tile_rows_cap(in_w, hid_w, out_w, h_bytes, o_bytes)
    tm, n_tiles = _choose_tiles(n_rows, cap, requested_tm=tm)

    cost = pl.CostEstimate(
        flops=2 * n_rows * in_w * hid_w + 2 * n_rows * hid_w * out_w,
        transcendentals=N * dim_output,
        bytes_accessed=(N * dim_emb * h_bytes
                        + (in_w * hid_w + hid_w * out_w) * w_bytes
                        + (hid_w + out_w) * 4
                        + N * dim_output * o_bytes),
    )

    out_f = pl.pallas_call(
        _imputer_kernel,
        out_shape=jax.ShapeDtypeStruct((n_rows, out_w), out_dtype),
        grid_spec=pltpu.PrefetchScalarGridSpec(
            num_scalar_prefetch=0,
            grid=(n_tiles,),
            in_specs=[
                pl.BlockSpec((tm, in_w), lambda i: (i, 0)),         # h row tile
                pl.BlockSpec((in_w, hid_w), lambda i: (0, 0)),      # W1 (block-diag)
                pl.BlockSpec((1, hid_w), lambda i: (0, 0)),         # b1 (tiled)
                pl.BlockSpec((hid_w, out_w), lambda i: (0, 0)),     # W2 (block-diag)
                pl.BlockSpec((1, out_w), lambda i: (0, 0)),         # b2 (tiled)
            ],
            out_specs=pl.BlockSpec((tm, out_w), lambda i: (i, 0)),
        ),
        compiler_params=pltpu.CompilerParams(
            dimension_semantics=("parallel",),           # megacore sharding (v7x)
            vmem_limit_bytes=48 * 1024 * 1024),          # clear v5e's 16 MiB default
        cost_estimate=cost,
    )(h_f, w1_f, b1_f, w2_f, b2_f)

    # Free row-major view back to [N, dim_output].
    return out_f.reshape(N, dim_output)


# --------------------------------------------------------------------------
# Reference (mirrors the kernel's precision: bf16 operands, f32 accumulate)
# --------------------------------------------------------------------------
def reference_forward(h, w1_t, b1, w2_t, b2, compute_dtype=jnp.bfloat16):
    hc = h.astype(compute_dtype).astype(jnp.float32)
    w1c = w1_t.astype(compute_dtype).astype(jnp.float32)
    w2c = w2_t.astype(compute_dtype).astype(jnp.float32)
    z = jnp.maximum(hc @ w1c + b1.astype(jnp.float32), 0.0)
    z = z.astype(compute_dtype).astype(jnp.float32)
    y = z @ w2c + b2.astype(jnp.float32)
    return jax.nn.sigmoid(y)


if __name__ == "__main__":
    key = jax.random.PRNGKey(0)
    k_w1, k_b1, k_w2, k_b2, kh0, kh1, kh2, kh3, kh4 = jax.random.split(key, 9)

    # Shapes implied by the module: h is [N, dim_emb]; output is [N, dim_output].
    dim_emb = 32
    dim_output = 40
    hiddens = int(round(0.8 * dim_output))  # = 32, matches Imputer.__init__

    # Deterministic synthetic parameters in PyTorch nn.Linear layout [out, in],
    # transposed to [in, out] for the kernel.
    w1 = jax.random.normal(k_w1, (hiddens, dim_emb), dtype=jnp.float32) * 0.1
    b1 = jax.random.normal(k_b1, (hiddens,), dtype=jnp.float32) * 0.1
    w2 = jax.random.normal(k_w2, (dim_output, hiddens), dtype=jnp.float32) * 0.1
    b2 = jax.random.normal(k_b2, (dim_output,), dtype=jnp.float32) * 0.1
    w1_t, w2_t = w1.T, w2.T

    cases = [
        ("tiny", 16, None, kh0),         # 8-way fold, single (partial) tile
        ("fold8", 600, None, kh1),       # 8-way fold, partial last block, no pad
        ("ragged", 601, None, kh2),      # N odd -> unfolded fallback path
        ("multi_tile", 608, 16, kh3),    # explicit small tm -> multi-step grid
        ("empty", 0, None, kh4),         # N == 0 early-return guard
    ]
    for name, n_rows, tm_req, kk in cases:
        h = jax.random.normal(kk, (n_rows, dim_emb), dtype=jnp.float32)
        out = jax.block_until_ready(
            imputer_forward(h, w1_t, b1, w2_t, b2, tm=tm_req))
        ref = reference_forward(h, w1_t, b1, w2_t, b2)
        assert out.shape == (n_rows, dim_output), name
        assert jnp.allclose(out.astype(jnp.float32), ref, atol=1e-2, rtol=1e-2), \
            f"mismatch vs reference ({name})"

    print("KERNEL_OK")
</pallas_src>

<mosaic_0001>
module attributes {stable_mosaic.version = 11 : i64} {
  func.func @_imputer_kernel(%arg0: i32, %arg1: memref<16x256xf32, #tpu.memory_space<vmem>>, %arg2: memref<256x256xbf16, #tpu.memory_space<vmem>>, %arg3: memref<1x256xf32, #tpu.memory_space<vmem>>, %arg4: memref<256x320xbf16, #tpu.memory_space<vmem>>, %arg5: memref<1x320xf32, #tpu.memory_space<vmem>>, %arg6: memref<16x320xf32, #tpu.memory_space<vmem>>) attributes {dimension_semantics = [#tpu.dimension_semantics<parallel>], iteration_bounds = array<i64: 1>, scalar_prefetch = 0 : i64, scratch_operands = 0 : i64, tpu.core_type = #tpu.core_type<tc>, window_params = [{transform_indices = @transform_0, window_bounds = array<i64: 16, 256>}, {pipeline_mode = #tpu.pipeline_mode<synchronous>, transform_indices = @transform_1, window_bounds = array<i64: 256, 256>}, {pipeline_mode = #tpu.pipeline_mode<synchronous>, transform_indices = @transform_2, window_bounds = array<i64: 1, 256>}, {pipeline_mode = #tpu.pipeline_mode<synchronous>, transform_indices = @transform_3, window_bounds = array<i64: 256, 320>}, {pipeline_mode = #tpu.pipeline_mode<synchronous>, transform_indices = @transform_4, window_bounds = array<i64: 1, 320>}, {transform_indices = @transform_5, window_bounds = array<i64: 16, 320>}]} {
    %c0 = arith.constant 0 : index
    %c0_0 = arith.constant 0 : index
    %0 = vector.load %arg1[%c0, %c0_0] : memref<16x256xf32, #tpu.memory_space<vmem>>, vector<16x256xf32>
    %1 = arith.truncf %0 : vector<16x256xf32> to vector<16x256xbf16>
    %c0_1 = arith.constant 0 : index
    %c0_2 = arith.constant 0 : index
    %2 = vector.load %arg2[%c0_1, %c0_2] : memref<256x256xbf16, #tpu.memory_space<vmem>>, vector<256x256xbf16>
    %cst = arith.constant dense<0.000000e+00> : vector<16x256xf32>
    %3 = tpu.matmul %1, %2, %cst {dimension_numbers = #tpu.dot_dimension_numbers<[1], [0], [0], [1], [0, 0, 1, 1], [], []>} : vector<16x256xbf16>, vector<256x256xbf16>, vector<16x256xf32> -> vector<16x256xf32>
    %c0_3 = arith.constant 0 : index
    %c0_4 = arith.constant 0 : index
    %4 = vector.load %arg3[%c0_3, %c0_4] : memref<1x256xf32, #tpu.memory_space<vmem>>, vector<1x256xf32>
    %5 = vector.broadcast %4 : vector<1x256xf32> to vector<16x256xf32>
    %6 = arith.addf %3, %5 : vector<16x256xf32>
    %cst_5 = arith.constant 0.000000e+00 : f32
    %7 = vector.broadcast %cst_5 : f32 to vector<16x256xf32>
    %8 = arith.maximumf %6, %7 : vector<16x256xf32>
    %9 = arith.truncf %8 : vector<16x256xf32> to vector<16x256xbf16>
    %c0_6 = arith.constant 0 : index
    %c0_7 = arith.constant 0 : index
    %10 = vector.load %arg4[%c0_6, %c0_7] : memref<256x320xbf16, #tpu.memory_space<vmem>>, vector<256x320xbf16>
    %cst_8 = arith.constant dense<0.000000e+00> : vector<16x320xf32>
    %11 = tpu.matmul %9, %10, %cst_8 {dimension_numbers = #tpu.dot_dimension_numbers<[1], [0], [0], [1], [0, 0, 1, 1], [], []>} : vector<16x256xbf16>, vector<256x320xbf16>, vector<16x320xf32> -> vector<16x320xf32>
    %c0_9 = arith.constant 0 : index
    %c0_10 = arith.constant 0 : index
    %12 = vector.load %arg5[%c0_9, %c0_10] : memref<1x320xf32, #tpu.memory_space<vmem>>, vector<1x320xf32>
    %13 = vector.broadcast %12 : vector<1x320xf32> to vector<16x320xf32>
    %14 = arith.addf %11, %13 : vector<16x320xf32>
    %15 = arith.negf %14 : vector<16x320xf32>
    %16 = math.exp %15 : vector<16x320xf32>
    %cst_11 = arith.constant 1.000000e+00 : f32
    %17 = vector.broadcast %cst_11 : f32 to vector<16x320xf32>
    %18 = arith.addf %17, %16 : vector<16x320xf32>
    %19 = arith.divf %17, %18 : vector<16x320xf32>
    %c0_12 = arith.constant 0 : index
    %c0_13 = arith.constant 0 : index
    %20 = vector.load %arg6[%c0_12, %c0_13] : memref<16x320xf32, #tpu.memory_space<vmem>>, vector<16x320xf32>
    tpu.vector_store %arg6[%c0_12, %c0_13], %19 {strides = array<i32>} : memref<16x320xf32, #tpu.memory_space<vmem>>, vector<16x320xf32>,
    return
  }
  func.func @transform_0(%arg0: i32) -> (i32, i32) {
    %c0_i32 = arith.constant 0 : i32
    %c0_i32_0 = arith.constant 0 : i32
    return %arg0, %c0_i32 : i32, i32
  }
  func.func @transform_1(%arg0: i32) -> (i32, i32) {
    %c0_i32 = arith.constant 0 : i32
    %c0_i32_0 = arith.constant 0 : i32
    %c0_i32_1 = arith.constant 0 : i32
    return %c0_i32, %c0_i32_0 : i32, i32
  }
  func.func @transform_2(%arg0: i32) -> (i32, i32) {
    %c0_i32 = arith.constant 0 : i32
    %c0_i32_0 = arith.constant 0 : i32
    %c0_i32_1 = arith.constant 0 : i32
    return %c0_i32, %c0_i32_0 : i32, i32
  }
  func.func @transform_3(%arg0: i32) -> (i32, i32) {
    %c0_i32 = arith.constant 0 : i32
    %c0_i32_0 = arith.constant 0 : i32
    %c0_i32_1 = arith.constant 0 : i32
    return %c0_i32, %c0_i32_0 : i32, i32
  }
  func.func @transform_4(%arg0: i32) -> (i32, i32) {
    %c0_i32 = arith.constant 0 : i32
    %c0_i32_0 = arith.constant 0 : i32
    %c0_i32_1 = arith.constant 0 : i32
    return %c0_i32, %c0_i32_0 : i32, i32
  }
  func.func @transform_5(%arg0: i32) -> (i32, i32) {
    %c0_i32 = arith.constant 0 : i32
    %c0_i32_0 = arith.constant 0 : i32
    return %arg0, %c0_i32 : i32, i32
  }
}

</mosaic_0001>

<llo_original>
// kernel: tpu_custom_call.1
$region0: #{tpu_custom_call.1}
  #allocation0 [shape = 'u32[]', space=smem, size = 0x4, offset = 0x4, fixed_abs, tag = 'smem constant byte address 0x4 - core index']
  #allocation1 [shape = 'u32[144,128]{1,0:T(1,128)}', space=vmem, size = 0x12000, scoped, tag = 'internal scratch']
  %s0 = inlined_call_operand.vmem [shape: f32[2,256], index: 0, kind: input, shape index: {}]
  %s1 = inlined_call_operand.vmem [shape: bf16[256,256], index: 1, kind: input, shape index: {}]
  %s2 = inlined_call_operand.vmem [shape: f32[1,256], index: 2, kind: input, shape index: {}]
  %s3 = inlined_call_operand.vmem [shape: bf16[256,320], index: 3, kind: input, shape index: {}]
  %s4 = inlined_call_operand.vmem [shape: f32[1,320], index: 4, kind: input, shape index: {}]
  %s5 = inlined_call_operand.hbm [shape: f32[2,320], index: 5, kind: output, shape index: {}]
  %s6 = sld [smem:[#allocation0]]
  $region30: #{tpu_custom_call.1} parent=0
    _
  %s8 = ssub.s32 1, %s6
  %s9 = scalar_select 0, %s8, %s6
  $region1: #{tpu_custom_call.1} parent=0
    #allocation2 [shape = 'u8[24576]{0}', space=vmem, size = 0x6000, scoped, tag = 'output window, operand 0, single buffered']
    #allocation3 [shape = 's32[1]{0}', space=sflag, size = 0x4, scoped, tag = 'scoped memory for tpu_custom_call.1']
    %10 = vsyncpa [#allocation3], 0
    // Predicated region
    $region2: #{tpu_custom_call.1} parent=1 // pred_check
      _
    $region3: #{tpu_custom_call.1} parent=1 // pred_check_branch
      %12 = sbr.rel (0) target = $region5
    $region4: #{tpu_custom_call.1} parent=1 // pred_region
      _
    $region5: #{tpu_custom_call.1} parent=1 // pred_fallthru
      _
    // Predicated region
    $region6: #{tpu_custom_call.1} parent=1 // pred_check
      _
    $region7: #{tpu_custom_call.1} parent=1 // pred_check_branch
      %14 = sbr.rel (0) target = $region9
    $region8: #{tpu_custom_call.1} parent=1 // pred_region
      _
    $region9: #{tpu_custom_call.1} parent=1 // pred_fallthru
      _
    // Predicated region
    $region10: #{tpu_custom_call.1} parent=1 // pred_check
      _
    $region11: #{tpu_custom_call.1} parent=1 // pred_check_branch
      %16 = sbr.rel (0) target = $region13
    $region12: #{tpu_custom_call.1} parent=1 // pred_region
      _
    $region13: #{tpu_custom_call.1} parent=1 // pred_fallthru
      _
    // Predicated region
    $region14: #{tpu_custom_call.1} parent=1 // pred_check
      _
    $region15: #{tpu_custom_call.1} parent=1 // pred_check_branch
      %18 = sbr.rel (0) target = $region17
    $region16: #{tpu_custom_call.1} parent=1 // pred_region
      _
    $region17: #{tpu_custom_call.1} parent=1 // pred_fallthru
      _
    // Predicated region
    $region18: #{tpu_custom_call.1} parent=1 // pred_check
      _
    $region19: #{tpu_custom_call.1} parent=1 // pred_check_branch
      %20 = sbr.rel (0) target = $region21
    $region20: #{tpu_custom_call.1} parent=1 // pred_region
      _
    $region21: #{tpu_custom_call.1} parent=1 // pred_fallthru
      _
    %v22 = vld [vmem:[%s0] sm:$0xf]
    %v23 = vld [vmem:[%s0 + $0x4] sm:$0xf]
    %v24 = vld [vmem:[%s0 + $0x8] sm:$0xf]
    %v25 = vld [vmem:[%s0 + $0xc] sm:$0xf]
    %v26 = vld [vmem:[%s0 + $0x10] sm:$0xf]
    %v27 = vld [vmem:[%s0 + $0x14] sm:$0xf]
    %v28 = vld [vmem:[%s0 + $0x18] sm:$0xf]
    %v29 = vld [vmem:[%s0 + $0x1c] sm:$0xf]
    %v38 = vcombine.low %v22, %v23
    %v39 = vcombine.low %v24, %v25
    %v41 = vunpack.c.l.s4 1983009808
    %v42 = vunpack.c.0.s8 %v41
    %v43 = vlaneseq
    %v44 = vshrl.u32 %v43, 7
    %v45 = vsub.s32 %v42, %v44
    %v46 = vrot.slane %v38, %v45
    %v48 = vunpack.c.l.s4 1983009808
    %v49 = vunpack.c.0.s8 %v48
    %v50 = vlaneseq
    %v51 = vshrl.u32 %v50, 7
    %v52 = vsub.s32 %v49, %v51
    %v53 = vrot.slane %v39, %v52
    %v54 = vcombine.low %v46, %v53
    %v55 = vcombine.high %v46, %v53
    %v56 = vcombine.low %v26, %v27
    %v57 = vcombine.low %v28, %v29
    %v59 = vunpack.c.l.s4 1983009808
    %v60 = vunpack.c.0.s8 %v59
    %v61 = vlaneseq
    %v62 = vshrl.u32 %v61, 7
    %v63 = vsub.s32 %v60, %v62
    %v64 = vrot.slane %v56, %v63
    %v66 = vunpack.c.l.s4 1983009808
    %v67 = vunpack.c.0.s8 %v66
    %v68 = vlaneseq
    %v69 = vshrl.u32 %v68, 7
    %v70 = vsub.s32 %v67, %v69
    %v71 = vrot.slane %v57, %v70
    %v72 = vcombine.low %v64, %v71
    %v73 = vcombine.high %v64, %v71
    %v78 = vpack.c.bf16 %v72, %v54
    %v79 = vpack.c.bf16 %v73, %v55
    %v80 = vld [vmem:[%s1] sm:$0xff]
    %v81 = vld [vmem:[%s1 + $0x8] sm:$0xff]
    %v82 = vld [vmem:[%s1 + $0x10] sm:$0xff]
    %v83 = vld [vmem:[%s1 + $0x18] sm:$0xff]
    %v84 = vld [vmem:[%s1 + $0x20] sm:$0xff]
    %v85 = vld [vmem:[%s1 + $0x28] sm:$0xff]
    %v86 = vld [vmem:[%s1 + $0x30] sm:$0xff]
    %v87 = vld [vmem:[%s1 + $0x38] sm:$0xff]
    %v88 = vld [vmem:[%s1 + $0x40] sm:$0xff]
    %v89 = vld [vmem:[%s1 + $0x48] sm:$0xff]
    %v90 = vld [vmem:[%s1 + $0x50] sm:$0xff]
    %v91 = vld [vmem:[%s1 + $0x58] sm:$0xff]
    %v92 = vld [vmem:[%s1 + $0x60] sm:$0xff]
    %v93 = vld [vmem:[%s1 + $0x68] sm:$0xff]
    %v94 = vld [vmem:[%s1 + $0x70] sm:$0xff]
    %v95 = vld [vmem:[%s1 + $0x78] sm:$0xff]
    %v96 = vld [vmem:[%s1 + $0x80] sm:$0xff]
    %v97 = vld [vmem:[%s1 + $0x88] sm:$0xff]
    %v98 = vld [vmem:[%s1 + $0x90] sm:$0xff]
    %v99 = vld [vmem:[%s1 + $0x98] sm:$0xff]
    %v100 = vld [vmem:[%s1 + $0xa0] sm:$0xff]
    %v101 = vld [vmem:[%s1 + $0xa8] sm:$0xff]
    %v102 = vld [vmem:[%s1 + $0xb0] sm:$0xff]
    %v103 = vld [vmem:[%s1 + $0xb8] sm:$0xff]
    %v104 = vld [vmem:[%s1 + $0xc0] sm:$0xff]
    %v105 = vld [vmem:[%s1 + $0xc8] sm:$0xff]
    %v106 = vld [vmem:[%s1 + $0xd0] sm:$0xff]
    %v107 = vld [vmem:[%s1 + $0xd8] sm:$0xff]
    %v108 = vld [vmem:[%s1 + $0xe0] sm:$0xff]
    %v109 = vld [vmem:[%s1 + $0xe8] sm:$0xff]
    %v110 = vld [vmem:[%s1 + $0xf0] sm:$0xff]
    %v111 = vld [vmem:[%s1 + $0xf8] sm:$0xff]
    %v112 = vld [vmem:[%s2] sm:$0x3]
    %v114 = vlaneseq
    %v115 = vshrl.u32 %v114, 7
    %v116 = vsub.s32 0, %v115
    %v117 = vrot.slane %v112, %v116
    %v118 = vlaneseq
    %v119 = vshrl.u32 %v118, 7
    %v120 = vsub.s32 1, %v119
    %v121 = vrot.slane %v112, %v120
    %v156 = vunpack.c.l.b16 %v80
    %v157 = vunpack.c.h.b16 %v80
    %v158 = vunpack.c.l.b16 %v81
    %v159 = vunpack.c.h.b16 %v81
    %v160 = vunpack.c.l.b16 %v82
    %v161 = vunpack.c.h.b16 %v82
    %v162 = vunpack.c.l.b16 %v83
    %v163 = vunpack.c.h.b16 %v83
    %v164 = vunpack.c.l.b16 %v84
    %v165 = vunpack.c.h.b16 %v84
    %v166 = vunpack.c.l.b16 %v85
    %v167 = vunpack.c.h.b16 %v85
    %v168 = vunpack.c.l.b16 %v86
    %v169 = vunpack.c.h.b16 %v86
    %v170 = vunpack.c.l.b16 %v87
    %v171 = vunpack.c.h.b16 %v87
    %v172 = vunpack.c.l.b16 %v88
    %v173 = vunpack.c.h.b16 %v88
    %v174 = vunpack.c.l.b16 %v89
    %v175 = vunpack.c.h.b16 %v89
    %v176 = vunpack.c.l.b16 %v90
    %v177 = vunpack.c.h.b16 %v90
    %v178 = vunpack.c.l.b16 %v91
    %v179 = vunpack.c.h.b16 %v91
    %v180 = vunpack.c.l.b16 %v92
    %v181 = vunpack.c.h.b16 %v92
    %v182 = vunpack.c.l.b16 %v93
    %v183 = vunpack.c.h.b16 %v93
    %v184 = vunpack.c.l.b16 %v94
    %v185 = vunpack.c.h.b16 %v94
    %v186 = vunpack.c.l.b16 %v95
    %v187 = vunpack.c.h.b16 %v95
    %v188 = vunpack.c.l.b16 %v96
    %v189 = vunpack.c.h.b16 %v96
    %v190 = vunpack.c.l.b16 %v97
    %v191 = vunpack.c.h.b16 %v97
    %v192 = vunpack.c.l.b16 %v98
    %v193 = vunpack.c.h.b16 %v98
    %v194 = vunpack.c.l.b16 %v99
    %v195 = vunpack.c.h.b16 %v99
    %v196 = vunpack.c.l.b16 %v100
    %v197 = vunpack.c.h.b16 %v100
    %v198 = vunpack.c.l.b16 %v101
    %v199 = vunpack.c.h.b16 %v101
    %v200 = vunpack.c.l.b16 %v102
    %v201 = vunpack.c.h.b16 %v102
    %v202 = vunpack.c.l.b16 %v103
    %v203 = vunpack.c.h.b16 %v103
    %v204 = vunpack.c.l.b16 %v104
    %v205 = vunpack.c.h.b16 %v104
    %v206 = vunpack.c.l.b16 %v105
    %v207 = vunpack.c.h.b16 %v105
    %v208 = vunpack.c.l.b16 %v106
    %v209 = vunpack.c.h.b16 %v106
    %v210 = vunpack.c.l.b16 %v107
    %v211 = vunpack.c.h.b16 %v107
    %v212 = vunpack.c.l.b16 %v108
    %v213 = vunpack.c.h.b16 %v108
    %v214 = vunpack.c.l.b16 %v109
    %v215 = vunpack.c.h.b16 %v109
    %v216 = vunpack.c.l.b16 %v110
    %v217 = vunpack.c.h.b16 %v110
    %v218 = vunpack.c.l.b16 %v111
    %v219 = vunpack.c.h.b16 %v111
    %v220 = vpack.c.b16 %v158, %v156
    %v221 = vpack.c.b16 %v159, %v157
    %v222 = vpack.c.b16 %v162, %v160
    %v223 = vpack.c.b16 %v163, %v161
    %v224 = vpack.c.b16 %v166, %v164
    %v225 = vpack.c.b16 %v167, %v165
    %v226 = vpack.c.b16 %v170, %v168
    %v227 = vpack.c.b16 %v171, %v169
    %v228 = vpack.c.b16 %v174, %v172
    %v229 = vpack.c.b16 %v175, %v173
    %v230 = vpack.c.b16 %v178, %v176
    %v231 = vpack.c.b16 %v179, %v177
    %v232 = vpack.c.b16 %v182, %v180
    %v233 = vpack.c.b16 %v183, %v181
    %v234 = vpack.c.b16 %v186, %v184
    %v235 = vpack.c.b16 %v187, %v185
    %v236 = vpack.c.b16 %v190, %v188
    %v237 = vpack.c.b16 %v191, %v189
    %v238 = vpack.c.b16 %v194, %v192
    %v239 = vpack.c.b16 %v195, %v193
    %v240 = vpack.c.b16 %v198, %v196
    %v241 = vpack.c.b16 %v199, %v197
    %v242 = vpack.c.b16 %v202, %v200
    %v243 = vpack.c.b16 %v203, %v201
    %v244 = vpack.c.b16 %v206, %v204
    %v245 = vpack.c.b16 %v207, %v205
    %v246 = vpack.c.b16 %v210, %v208
    %v247 = vpack.c.b16 %v211, %v209
    %v248 = vpack.c.b16 %v214, %v212
    %v249 = vpack.c.b16 %v215, %v213
    %v250 = vpack.c.b16 %v218, %v216
    %v251 = vpack.c.b16 %v219, %v217
    %284 = vmatprep.subr.bf16.mxu0 %v221
    %285 = vmatpush1.bf16.msra.mxu0 %v220
    %286 = vmatprep.subr.bf16.mxu0 %v223
    %287 = vmatpush1.bf16.msra.mxu0 %v222
    %288 = vmatprep.subr.bf16.mxu0 %v225
    %289 = vmatpush1.bf16.msra.mxu0 %v224
    %290 = vmatprep.subr.bf16.mxu0 %v227
    %291 = vmatpush1.bf16.msra.mxu0 %v226
    %292 = vmatprep.subr.bf16.mxu0 %v229
    %293 = vmatpush1.bf16.msra.mxu0 %v228
    %294 = vmatprep.subr.bf16.mxu0 %v231
    %295 = vmatpush1.bf16.msra.mxu0 %v230
    %296 = vmatprep.subr.bf16.mxu0 %v233
    %297 = vmatpush1.bf16.msra.mxu0 %v232
    %298 = vmatprep.subr.bf16.mxu0 %v235
    %299 = vmatpush1.bf16.msra.mxu0 %v234
    %300 = vmatprep.subr.bf16.mxu0 %v237
    %301 = vmatpush1.bf16.msra.mxu0 %v236
    %302 = vmatprep.subr.bf16.mxu0 %v239
    %303 = vmatpush1.bf16.msra.mxu0 %v238
    %304 = vmatprep.subr.bf16.mxu0 %v241
    %305 = vmatpush1.bf16.msra.mxu0 %v240
    %306 = vmatprep.subr.bf16.mxu0 %v243
    %307 = vmatpush1.bf16.msra.mxu0 %v242
    %308 = vmatprep.subr.bf16.mxu0 %v245
    %309 = vmatpush1.bf16.msra.mxu0 %v244
    %310 = vmatprep.subr.bf16.mxu0 %v247
    %311 = vmatpush1.bf16.msra.mxu0 %v246
    %312 = vmatprep.subr.bf16.mxu0 %v249
    %313 = vmatpush1.bf16.msra.mxu0 %v248
    %314 = vmatprep.subr.bf16.mxu0 %v251
    %315 = vmatpush1.bf16.msra.mxu0 %v250
    %316 = vmatprep.mubr.bf16.mxu0 %v79
    %317 = vmatmul.mubr.bf16.gmra.mrb[0].mxu0 %v78
    %v318 = vpop.f32.mrb[0].mxu0
    %v319 = vadd.f32 %v117, %v318
    %v320 = vpop.f32.mrb[0].mxu0
    %v321 = vadd.f32 %v121, %v320
    %v322 = vpop.f32.mrb[0].mxu0
    %v323 = vadd.f32 %v117, %v322
    %v324 = vpop.f32.mrb[0].mxu0
    %v325 = vadd.f32 %v121, %v324
    %326 = vdwg.mxu0
    %v327 = vmax.f32 %v319, 0.0
    %v328 = vmax.f32 %v321, 0.0
    %v329 = vmax.f32 %v323, 0.0
    %v330 = vmax.f32 %v325, 0.0
    %v331 = vpack.c.bf16 %v329, %v327
    %v332 = vpack.c.bf16 %v330, %v328
    %v333 = vld [vmem:[%s3] sm:$0xff]
    %v334 = vld [vmem:[%s3 + $0x8] sm:$0xf]
    %v335 = vld [vmem:[%s3 + $0xc] sm:$0xff]
    %v336 = vld [vmem:[%s3 + $0x14] sm:$0xf]
    %v337 = vld [vmem:[%s3 + $0x18] sm:$0xff]
    %v338 = vld [vmem:[%s3 + $0x20] sm:$0xf]
    %v339 = vld [vmem:[%s3 + $0x24] sm:$0xff]
    %v340 = vld [vmem:[%s3 + $0x2c] sm:$0xf]
    %v341 = vld [vmem:[%s3 + $0x30] sm:$0xff]
    %v342 = vld [vmem:[%s3 + $0x38] sm:$0xf]
    %v343 = vld [vmem:[%s3 + $0x3c] sm:$0xff]
    %v344 = vld [vmem:[%s3 + $0x44] sm:$0xf]
    %v345 = vld [vmem:[%s3 + $0x48] sm:$0xff]
    %v346 = vld [vmem:[%s3 + $0x50] sm:$0xf]
    %v347 = vld [vmem:[%s3 + $0x54] sm:$0xff]
    %v348 = vld [vmem:[%s3 + $0x5c] sm:$0xf]
    %v349 = vld [vmem:[%s3 + $0x60] sm:$0xff]
    %v350 = vld [vmem:[%s3 + $0x68] sm:$0xf]
    %v351 = vld [vmem:[%s3 + $0x6c] sm:$0xff]
    %v352 = vld [vmem:[%s3 + $0x74] sm:$0xf]
    %v353 = vld [vmem:[%s3 + $0x78] sm:$0xff]
    %v354 = vld [vmem:[%s3 + $0x80] sm:$0xf]
    %v355 = vld [vmem:[%s3 + $0x84] sm:$0xff]
    %v356 = vld [vmem:[%s3 + $0x8c] sm:$0xf]
    %v357 = vld [vmem:[%s3 + $0x90] sm:$0xff]
    %v358 = vld [vmem:[%s3 + $0x98] sm:$0xf]
    %v359 = vld [vmem:[%s3 + $0x9c] sm:$0xff]
    %v360 = vld [vmem:[%s3 + $0xa4] sm:$0xf]
    %v361 = vld [vmem:[%s3 + $0xa8] sm:$0xff]
    %v362 = vld [vmem:[%s3 + $0xb0] sm:$0xf]
    %v363 = vld [vmem:[%s3 + $0xb4] sm:$0xff]
    %v364 = vld [vmem:[%s3 + $0xbc] sm:$0xf]
    %v365 = vld [vmem:[%s3 + $0xc0] sm:$0xff]
    %v366 = vld [vmem:[%s3 + $0xc8] sm:$0xf]
    %v367 = vld [vmem:[%s3 + $0xcc] sm:$0xff]
    %v368 = vld [vmem:[%s3 + $0xd4] sm:$0xf]
    %v369 = vld [vmem:[%s3 + $0xd8] sm:$0xff]
    %v370 = vld [vmem:[%s3 + $0xe0] sm:$0xf]
    %v371 = vld [vmem:[%s3 + $0xe4] sm:$0xff]
    %v372 = vld [vmem:[%s3 + $0xec] sm:$0xf]
    %v373 = vld [vmem:[%s3 + $0xf0] sm:$0xff]
    %v374 = vld [vmem:[%s3 + $0xf8] sm:$0xf]
    %v375 = vld [vmem:[%s3 + $0xfc] sm:$0xff]
    %v376 = vld [vmem:[%s3 + $0x104] sm:$0xf]
    %v377 = vld [vmem:[%s3 + $0x108] sm:$0xff]
    %v378 = vld [vmem:[%s3 + $0x110] sm:$0xf]
    %v379 = vld [vmem:[%s3 + $0x114] sm:$0xff]
    %v380 = vld [vmem:[%s3 + $0x11c] sm:$0xf]
    %v381 = vld [vmem:[%s3 + $0x120] sm:$0xff]
    %v382 = vld [vmem:[%s3 + $0x128] sm:$0xf]
    %v383 = vld [vmem:[%s3 + $0x12c] sm:$0xff]
    %v384 = vld [vmem:[%s3 + $0x134] sm:$0xf]
    %v385 = vld [vmem:[%s3 + $0x138] sm:$0xff]
    %v386 = vld [vmem:[%s3 + $0x140] sm:$0xf]
    %v387 = vld [vmem:[%s3 + $0x144] sm:$0xff]
    %v388 = vld [vmem:[%s3 + $0x14c] sm:$0xf]
    %v389 = vld [vmem:[%s3 + $0x150] sm:$0xff]
    %v390 = vld [vmem:[%s3 + $0x158] sm:$0xf]
    %v391 = vld [vmem:[%s3 + $0x15c] sm:$0xff]
    %v392 = vld [vmem:[%s3 + $0x164] sm:$0xf]
    %v393 = vld [vmem:[%s3 + $0x168] sm:$0xff]
    %v394 = vld [vmem:[%s3 + $0x170] sm:$0xf]
    %v395 = vld [vmem:[%s3 + $0x174] sm:$0xff]
    %v396 = vld [vmem:[%s3 + $0x17c] sm:$0xf]
    %v397 = vld [vmem:[%s4] sm:$0x7]
    %v399 = vlaneseq
    %v400 = vshrl.u32 %v399, 7
    %v401 = vsub.s32 0, %v400
    %v402 = vrot.slane %v397, %v401
    %v403 = vlaneseq
    %v404 = vshrl.u32 %v403, 7
    %v405 = vsub.s32 1, %v404
    %v406 = vrot.slane %v397, %v405
    %v407 = vlaneseq
    %v408 = vshrl.u32 %v407, 7
    %v409 = vsub.s32 2, %v408
    %v410 = vrot.slane %v397, %v409
    %v478 = vunpack.c.l.b16 %v333
    %v479 = vunpack.c.h.b16 %v333
    %v480 = vunpack.c.l.b16 %v334
    %v481 = vunpack.c.l.b16 %v335
    %v482 = vunpack.c.h.b16 %v335
    %v483 = vunpack.c.l.b16 %v336
    %v484 = vunpack.c.l.b16 %v337
    %v485 = vunpack.c.h.b16 %v337
    %v486 = vunpack.c.l.b16 %v338
    %v487 = vunpack.c.l.b16 %v339
    %v488 = vunpack.c.h.b16 %v339
    %v489 = vunpack.c.l.b16 %v340
    %v490 = vunpack.c.l.b16 %v341
    %v491 = vunpack.c.h.b16 %v341
    %v492 = vunpack.c.l.b16 %v342
    %v493 = vunpack.c.l.b16 %v343
    %v494 = vunpack.c.h.b16 %v343
    %v495 = vunpack.c.l.b16 %v344
    %v496 = vunpack.c.l.b16 %v345
    %v497 = vunpack.c.h.b16 %v345
    %v498 = vunpack.c.l.b16 %v346
    %v499 = vunpack.c.l.b16 %v347
    %v500 = vunpack.c.h.b16 %v347
    %v501 = vunpack.c.l.b16 %v348
    %v502 = vunpack.c.l.b16 %v349
    %v503 = vunpack.c.h.b16 %v349
    %v504 = vunpack.c.l.b16 %v350
    %v505 = vunpack.c.l.b16 %v351
    %v506 = vunpack.c.h.b16 %v351
    %v507 = vunpack.c.l.b16 %v352
    %v508 = vunpack.c.l.b16 %v353
    %v509 = vunpack.c.h.b16 %v353
    %v510 = vunpack.c.l.b16 %v354
    %v511 = vunpack.c.l.b16 %v355
    %v512 = vunpack.c.h.b16 %v355
    %v513 = vunpack.c.l.b16 %v356
    %v514 = vunpack.c.l.b16 %v357
    %v515 = vunpack.c.h.b16 %v357
    %v516 = vunpack.c.l.b16 %v358
    %v517 = vunpack.c.l.b16 %v359
    %v518 = vunpack.c.h.b16 %v359
    %v519 = vunpack.c.l.b16 %v360
    %v520 = vunpack.c.l.b16 %v361
    %v521 = vunpack.c.h.b16 %v361
    %v522 = vunpack.c.l.b16 %v362
    %v523 = vunpack.c.l.b16 %v363
    %v524 = vunpack.c.h.b16 %v363
    %v525 = vunpack.c.l.b16 %v364
    %v526 = vunpack.c.l.b16 %v365
    %v527 = vunpack.c.h.b16 %v365
    %v528 = vunpack.c.l.b16 %v366
    %v529 = vunpack.c.l.b16 %v367
    %v530 = vunpack.c.h.b16 %v367
    %v531 = vunpack.c.l.b16 %v368
    %v532 = vunpack.c.l.b16 %v369
    %v533 = vunpack.c.h.b16 %v369
    %v534 = vunpack.c.l.b16 %v370
    %v535 = vunpack.c.l.b16 %v371
    %v536 = vunpack.c.h.b16 %v371
    %v537 = vunpack.c.l.b16 %v372
    %v538 = vunpack.c.l.b16 %v373
    %v539 = vunpack.c.h.b16 %v373
    %v540 = vunpack.c.l.b16 %v374
    %v541 = vunpack.c.l.b16 %v375
    %v542 = vunpack.c.h.b16 %v375
    %v543 = vunpack.c.l.b16 %v376
    %v544 = vunpack.c.l.b16 %v377
    %v545 = vunpack.c.h.b16 %v377
    %v546 = vunpack.c.l.b16 %v378
    %v547 = vunpack.c.l.b16 %v379
    %v548 = vunpack.c.h.b16 %v379
    %v549 = vunpack.c.l.b16 %v380
    %v550 = vunpack.c.l.b16 %v381
    %v551 = vunpack.c.h.b16 %v381
    %v552 = vunpack.c.l.b16 %v382
    %v553 = vunpack.c.l.b16 %v383
    %v554 = vunpack.c.h.b16 %v383
    %v555 = vunpack.c.l.b16 %v384
    %v556 = vunpack.c.l.b16 %v385
    %v557 = vunpack.c.h.b16 %v385
    %v558 = vunpack.c.l.b16 %v386
    %v559 = vunpack.c.l.b16 %v387
    %v560 = vunpack.c.h.b16 %v387
    %v561 = vunpack.c.l.b16 %v388
    %v562 = vunpack.c.l.b16 %v389
    %v563 = vunpack.c.h.b16 %v389
    %v564 = vunpack.c.l.b16 %v390
    %v565 = vunpack.c.l.b16 %v391
    %v566 = vunpack.c.h.b16 %v391
    %v567 = vunpack.c.l.b16 %v392
    %v568 = vunpack.c.l.b16 %v393
    %v569 = vunpack.c.h.b16 %v393
    %v570 = vunpack.c.l.b16 %v394
    %v571 = vunpack.c.l.b16 %v395
    %v572 = vunpack.c.h.b16 %v395
    %v573 = vunpack.c.l.b16 %v396
    %v574 = vpack.c.b16 %v481, %v478
    %v575 = vpack.c.b16 %v482, %v479
    %v576 = vpack.c.b16 %v483, %v480
    %v577 = vpack.c.b16 %v487, %v484
    %v578 = vpack.c.b16 %v488, %v485
    %v579 = vpack.c.b16 %v489, %v486
    %v580 = vpack.c.b16 %v493, %v490
    %v581 = vpack.c.b16 %v494, %v491
    %v582 = vpack.c.b16 %v495, %v492
    %v583 = vpack.c.b16 %v499, %v496
    %v584 = vpack.c.b16 %v500, %v497
    %v585 = vpack.c.b16 %v501, %v498
    %v586 = vpack.c.b16 %v505, %v502
    %v587 = vpack.c.b16 %v506, %v503
    %v588 = vpack.c.b16 %v507, %v504
    %v589 = vpack.c.b16 %v511, %v508
    %v590 = vpack.c.b16 %v512, %v509
    %v591 = vpack.c.b16 %v513, %v510
    %v592 = vpack.c.b16 %v517, %v514
    %v593 = vpack.c.b16 %v518, %v515
    %v594 = vpack.c.b16 %v519, %v516
    %v595 = vpack.c.b16 %v523, %v520
    %v596 = vpack.c.b16 %v524, %v521
    %v597 = vpack.c.b16 %v525, %v522
    %v598 = vpack.c.b16 %v529, %v526
    %v599 = vpack.c.b16 %v530, %v527
    %v600 = vpack.c.b16 %v531, %v528
    %v601 = vpack.c.b16 %v535, %v532
    %v602 = vpack.c.b16 %v536, %v533
    %v603 = vpack.c.b16 %v537, %v534
    %v604 = vpack.c.b16 %v541, %v538
    %v605 = vpack.c.b16 %v542, %v539
    %v606 = vpack.c.b16 %v543, %v540
    %v607 = vpack.c.b16 %v547, %v544
    %v608 = vpack.c.b16 %v548, %v545
    %v609 = vpack.c.b16 %v549, %v546
    %v610 = vpack.c.b16 %v553, %v550
    %v611 = vpack.c.b16 %v554, %v551
    %v612 = vpack.c.b16 %v555, %v552
    %v613 = vpack.c.b16 %v559, %v556
    %v614 = vpack.c.b16 %v560, %v557
    %v615 = vpack.c.b16 %v561, %v558
    %v616 = vpack.c.b16 %v565, %v562
    %v617 = vpack.c.b16 %v566, %v563
    %v618 = vpack.c.b16 %v567, %v564
    %v619 = vpack.c.b16 %v571, %v568
    %v620 = vpack.c.b16 %v572, %v569
    %v621 = vpack.c.b16 %v573, %v570
    %670 = vmatprep.subr.bf16.mxu0 %v575
    %671 = vmatpush1.bf16.msra.mxu0 %v574
    %672 = vmatprep.subr.bf16.mxu0 %v578
    %673 = vmatpush1.bf16.msra.mxu0 %v577
    %674 = vmatprep.subr.bf16.mxu0 %v581
    %675 = vmatpush1.bf16.msra.mxu0 %v580
    %676 = vmatprep.subr.bf16.mxu0 %v584
    %677 = vmatpush1.bf16.msra.mxu0 %v583
    %678 = vmatprep.subr.bf16.mxu0 %v587
    %679 = vmatpush1.bf16.msra.mxu0 %v586
    %680 = vmatprep.subr.bf16.mxu0 %v590
    %681 = vmatpush1.bf16.msra.mxu0 %v589
    %682 = vmatprep.subr.bf16.mxu0 %v593
    %683 = vmatpush1.bf16.msra.mxu0 %v592
    %684 = vmatprep.subr.bf16.mxu0 %v596
    %685 = vmatpush1.bf16.msra.mxu0 %v595
    %686 = vmatprep.subr.bf16.mxu0 %v599
    %687 = vmatpush1.bf16.msra.mxu0 %v598
    %688 = vmatprep.subr.bf16.mxu0 %v602
    %689 = vmatpush1.bf16.msra.mxu0 %v601
    %690 = vmatprep.subr.bf16.mxu0 %v605
    %691 = vmatpush1.bf16.msra.mxu0 %v604
    %692 = vmatprep.subr.bf16.mxu0 %v608
    %693 = vmatpush1.bf16.msra.mxu0 %v607
    %694 = vmatprep.subr.bf16.mxu0 %v611
    %695 = vmatpush1.bf16.msra.mxu0 %v610
    %696 = vmatprep.subr.bf16.mxu0 %v614
    %697 = vmatpush1.bf16.msra.mxu0 %v613
    %698 = vmatprep.subr.bf16.mxu0 %v617
    %699 = vmatpush1.bf16.msra.mxu0 %v616
    %700 = vmatprep.subr.bf16.mxu0 %v620
    %701 = vmatpush1.bf16.msra.mxu0 %v619
    %702 = vmatprep.mubr.bf16.mxu0 %v332
    %703 = vmatmul.mubr.bf16.gmra.mrb[0].mxu0 %v331
    %v704 = vpop.f32.mrb[0].mxu0
    %v705 = vadd.f32 %v402, %v704
    %v706 = vpop.f32.mrb[0].mxu0
    %v707 = vadd.f32 %v406, %v706
    %v708 = vpop.f32.mrb[0].mxu0
    %v709 = vadd.f32 %v402, %v708
    %v710 = vpop.f32.mrb[0].mxu0
    %v711 = vadd.f32 %v406, %v710
    %712 = vdwg.mxu0
    %713 = vmatprep.subr.bf16.mxu0 0
    %714 = vmatpush1.bf16.msra.mxu0 %v576
    %715 = vmatprep.subr.bf16.mxu0 0
    %716 = vmatpush1.bf16.msra.mxu0 %v579
    %717 = vmatprep.subr.bf16.mxu0 0
    %718 = vmatpush1.bf16.msra.mxu0 %v582
    %719 = vmatprep.subr.bf16.mxu0 0
    %720 = vmatpush1.bf16.msra.mxu0 %v585
    %721 = vmatprep.subr.bf16.mxu0 0
    %722 = vmatpush1.bf16.msra.mxu0 %v588
    %723 = vmatprep.subr.bf16.mxu0 0
    %724 = vmatpush1.bf16.msra.mxu0 %v591
    %725 = vmatprep.subr.bf16.mxu0 0
    %726 = vmatpush1.bf16.msra.mxu0 %v594
    %727 = vmatprep.subr.bf16.mxu0 0
    %728 = vmatpush1.bf16.msra.mxu0 %v597
    %729 = vmatprep.subr.bf16.mxu0 0
    %730 = vmatpush1.bf16.msra.mxu0 %v600
    %731 = vmatprep.subr.bf16.mxu0 0
    %732 = vmatpush1.bf16.msra.mxu0 %v603
    %733 = vmatprep.subr.bf16.mxu0 0
    %734 = vmatpush1.bf16.msra.mxu0 %v606
    %735 = vmatprep.subr.bf16.mxu0 0
    %736 = vmatpush1.bf16.msra.mxu0 %v609
    %737 = vmatprep.subr.bf16.mxu0 0
    %738 = vmatpush1.bf16.msra.mxu0 %v612
    %739 = vmatprep.subr.bf16.mxu0 0
    %740 = vmatpush1.bf16.msra.mxu0 %v615
    %741 = vmatprep.subr.bf16.mxu0 0
    %742 = vmatpush1.bf16.msra.mxu0 %v618
    %743 = vmatprep.subr.bf16.mxu0 0
    %744 = vmatpush1.bf16.msra.mxu0 %v621
    %745 = vmatprep.mubr.bf16.mxu0 %v332
    %746 = vmatmul.mubr.bf16.gmra.mrb[0].mxu0 %v331
    %v747 = vpop.f32.mrb[0].mxu0
    %v748 = vadd.f32 %v410, %v747
    %v749 = vpop.f32.mrb[0].mxu0
    %v750 = vpop.f32.mrb[0].mxu0
    %v751 = vadd.f32 %v410, %v750
    %v752 = vpop.f32.mrb[0].mxu0
    %753 = vdwg.mxu0
    %v754 = vxor.u32 %v705, 2147483648
    %v755 = vxor.u32 %v707, 2147483648
    %v756 = vxor.u32 %v748, 2147483648
    %v757 = vxor.u32 %v709, 2147483648
    %v758 = vxor.u32 %v711, 2147483648
    %v759 = vxor.u32 %v751, 2147483648
    %v760 = vmul.f32 %v754, 1.442695
    %v761 = vpow.pop %v760
    %v762 = vmul.f32 %v755, 1.442695
    %v763 = vpow.pop %v762
    %v764 = vmul.f32 %v756, 1.442695
    %v765 = vpow.pop %v764
    %v766 = vmul.f32 %v757, 1.442695
    %v767 = vpow.pop %v766
    %v768 = vmul.f32 %v758, 1.442695
    %v769 = vpow.pop %v768
    %v770 = vmul.f32 %v759, 1.442695
    %v771 = vpow.pop %v770
    %v772 = vadd.f32 %v761, 1.0
    %v773 = vadd.f32 %v763, 1.0
    %v774 = vadd.f32 %v765, 1.0
    %v775 = vadd.f32 %v767, 1.0
    %v776 = vadd.f32 %v769, 1.0
    %v777 = vadd.f32 %v771, 1.0
    %v778 = vrcp.pop %v772
    %v779 = vmul.f32 1.0, %v778
    %v780 = vrcp.pop %v773
    %v781 = vmul.f32 1.0, %v780
    %v782 = vrcp.pop %v774
    %v783 = vmul.f32 1.0, %v782
    %v784 = vrcp.pop %v775
    %v785 = vmul.f32 1.0, %v784
    %v786 = vrcp.pop %v776
    %v787 = vmul.f32 1.0, %v786
    %v788 = vrcp.pop %v777
    %v789 = vmul.f32 1.0, %v788
    %v796 = vcombine.low %v779, %v781
    %v797 = vcombine.high %v779, %v781
    %v798 = vcombine.high %v783, %v783
    %v800 = vunpack.c.l.s4 1983009808
    %v801 = vunpack.c.0.s8 %v800
    %v802 = vlaneseq
    %v803 = vshrl.u32 %v802, 7
    %v804 = vsub.s32 %v801, %v803
    %v805 = vrot.slane %v796, %v804
    %v807 = vunpack.c.l.s4 1983009808
    %v808 = vunpack.c.0.s8 %v807
    %v809 = vlaneseq
    %v810 = vshrl.u32 %v809, 7
    %v811 = vsub.s32 %v808, %v810
    %v812 = vrot.slane %v797, %v811
    %v814 = vunpack.c.l.s4 1983009808
    %v815 = vunpack.c.0.s8 %v814
    %v816 = vlaneseq
    %v817 = vshrl.u32 %v816, 7
    %v818 = vsub.s32 %v815, %v817
    %v819 = vrot.slane %v783, %v818
    %v821 = vunpack.c.l.s4 1983009808
    %v822 = vunpack.c.0.s8 %v821
    %v823 = vlaneseq
    %v824 = vshrl.u32 %v823, 7
    %v825 = vsub.s32 %v822, %v824
    %v826 = vrot.slane %v798, %v825
    %v827 = vcombine.low %v805, %v819
    %v828 = vcombine.high %v805, %v819
    %v829 = vcombine.low %v812, %v826
    %v830 = vcombine.high %v812, %v826
    %v831 = vcombine.low %v785, %v787
    %v832 = vcombine.high %v785, %v787
    %v833 = vcombine.high %v789, %v789
    %v835 = vunpack.c.l.s4 1983009808
    %v836 = vunpack.c.0.s8 %v835
    %v837 = vlaneseq
    %v838 = vshrl.u32 %v837, 7
    %v839 = vsub.s32 %v836, %v838
    %v840 = vrot.slane %v831, %v839
    %v842 = vunpack.c.l.s4 1983009808
    %v843 = vunpack.c.0.s8 %v842
    %v844 = vlaneseq
    %v845 = vshrl.u32 %v844, 7
    %v846 = vsub.s32 %v843, %v845
    %v847 = vrot.slane %v832, %v846
    %v849 = vunpack.c.l.s4 1983009808
    %v850 = vunpack.c.0.s8 %v849
    %v851 = vlaneseq
    %v852 = vshrl.u32 %v851, 7
    %v853 = vsub.s32 %v850, %v852
    %v854 = vrot.slane %v789, %v853
    %v856 = vunpack.c.l.s4 1983009808
    %v857 = vunpack.c.0.s8 %v856
    %v858 = vlaneseq
    %v859 = vshrl.u32 %v858, 7
    %v860 = vsub.s32 %v857, %v859
    %v861 = vrot.slane %v833, %v860
    %v862 = vcombine.low %v840, %v854
    %v863 = vcombine.high %v840, %v854
    %v864 = vcombine.low %v847, %v861
    %v865 = vcombine.high %v847, %v861
    %vm874 = vcmask 1041408
    %vm875 = vcmask 1043458
    %vm876 = vmor %vm875, %vm874
    %vm877 = vcmask 521220
    %vm878 = vmor %vm877, %vm876
    %879 = vst.msk [vmem:[#allocation2] sm:$0x3f] %vm878, %v827
    %880 = vst.msk [vmem:[#allocation2 + $0x6] sm:$0x3f] %vm878, %v828
    %881 = vst.msk [vmem:[#allocation2 + $0xc] sm:$0x3f] %vm878, %v829
    %882 = vst.msk [vmem:[#allocation2 + $0x12] sm:$0x3f] %vm878, %v830
    %883 = vst.msk [vmem:[#allocation2 + $0x18] sm:$0x3f] %vm878, %v862
    %884 = vst.msk [vmem:[#allocation2 + $0x1e] sm:$0x3f] %vm878, %v863
    %885 = vst.msk [vmem:[#allocation2 + $0x24] sm:$0x3f] %vm878, %v864
    %886 = vst.msk [vmem:[#allocation2 + $0x2a] sm:$0x3f] %vm878, %v865
    // Predicated region
    $region22: #{tpu_custom_call.1} parent=1 // pred_check
      _
    $region23: #{tpu_custom_call.1} parent=1 // pred_check_branch
      %888 = sbr.rel (0) target = $region25
    $region24: #{tpu_custom_call.1} parent=1 // pred_region
      %s890 = ssub.s32 768, 96
      %891 = vsyncadd [#allocation3], %s890
      %s892 = sshll.u32 [#allocation2], 4
      %s893 = int_to_ptr.vmem [resolvable:$true] %s892
      %898 = dma.vmem_to_hbm [thread:$0]  %s893, 96, %s5, [#allocation3], 96, 96, 6
    $region25: #{tpu_custom_call.1} parent=1 // pred_fallthru
      _
    // Predicated region
    $region26: #{tpu_custom_call.1} parent=1 // pred_check
      _
    $region27: #{tpu_custom_call.1} parent=1 // pred_check_branch
      %900 = sbr.rel (0) target = $region29
    $region28: #{tpu_custom_call.1} parent=1 // pred_region
      %901 = dma.done [#allocation3], 768
    $region29: #{tpu_custom_call.1} parent=1 // pred_fallthru
      _
    %902 = vsyncpa [#allocation3], 1

</llo_original>
